<compile_context>
chip_gen: v6e
topology: v6e:2x2x1
jax: 0.10.0
libtpu: 0.0.40
codegen_flags: <defaults>
</compile_context>

<pallas_src>
import math
import numpy as np
import jax
import jax.numpy as jnp
from jax.experimental import pallas as pl
from jax.experimental.pallas import tpu as pltpu


def _round_up(x, m):
    return ((x + m - 1) // m) * m


# ----------------------------------------------------------------------------
# Setup math (mirrors LinearResample::GetNumOutputSamples / SetIndexesAndWeights)
# ----------------------------------------------------------------------------
def _get_num_lr_output_samples(input_num_samp, samp_rate_in, samp_rate_out):
    samp_rate_in = int(samp_rate_in)
    samp_rate_out = int(samp_rate_out)
    tick_freq = abs(samp_rate_in * samp_rate_out) // math.gcd(samp_rate_in, samp_rate_out)
    ticks_per_input_period = tick_freq // samp_rate_in
    interval_length_in_ticks = input_num_samp * ticks_per_input_period
    if interval_length_in_ticks <= 0:
        return 0
    ticks_per_output_period = tick_freq // samp_rate_out
    last_output_samp = interval_length_in_ticks // ticks_per_output_period
    if last_output_samp * ticks_per_output_period == interval_length_in_ticks:
        last_output_samp -= 1
    return last_output_samp + 1


def _get_lr_indices_and_weights(orig_freq, new_freq, output_samples_in_unit,
                                window_width, lowpass_cutoff, lowpass_filter_width):
    assert lowpass_cutoff < min(orig_freq, new_freq) / 2
    output_t = np.arange(0, output_samples_in_unit, dtype=np.float64) / new_freq
    min_t = output_t - window_width
    max_t = output_t + window_width
    min_input_index = np.ceil(min_t * orig_freq)
    max_input_index = np.floor(max_t * orig_freq)
    num_indices = max_input_index - min_input_index + 1
    max_weight_width = int(num_indices.max())
    j = np.arange(max_weight_width)[None, :]
    input_index = min_input_index[:, None] + j
    delta_t = input_index / orig_freq - output_t[:, None]
    weights = np.zeros_like(delta_t)
    inside = np.abs(delta_t) < window_width
    weights[inside] = 0.5 * (
        1.0 + np.cos(2.0 * math.pi * lowpass_cutoff / lowpass_filter_width * delta_t[inside]))
    eq0 = delta_t == 0.0
    neq = ~eq0
    weights[neq] *= np.sin(2.0 * math.pi * lowpass_cutoff * delta_t[neq]) / (math.pi * delta_t[neq])
    weights[eq0] *= 2.0 * lowpass_cutoff
    weights /= orig_freq
    return min_input_index.astype(np.int64), weights  # int64 [G], float64 [G, W]


# ----------------------------------------------------------------------------
# Pallas kernel: tiled f32 matmul on the MXU (the resampler hot path).
#   out[m, g] = sum_k frames[m, k] * dense_w[k, g]
# ----------------------------------------------------------------------------
def _matmul_kernel(a_ref, b_ref, o_ref, acc_ref):
    @pl.when(pl.program_id(2) == 0)
    def _():
        acc_ref[...] = jnp.zeros_like(acc_ref)

    acc_ref[...] += jnp.dot(a_ref[...], b_ref[...], preferred_element_type=jnp.float32)

    @pl.when(pl.program_id(2) == pl.num_programs(2) - 1)
    def _():
        o_ref[...] = acc_ref[...].astype(o_ref.dtype)


def polyphase_matmul_pallas(frames, dense_w, tm, tn, tk):
    """frames [Mp, Kp] f32 x dense_w [Kp, Gp] f32 -> [Mp, Gp] f32."""
    Mp, Kp = frames.shape
    Kp2, Gp = dense_w.shape
    assert Kp == Kp2 and Mp % tm == 0 and Gp % tn == 0 and Kp % tk == 0
    return pl.pallas_call(
        _matmul_kernel,
        out_shape=jax.ShapeDtypeStruct((Mp, Gp), jnp.float32),
        grid_spec=pltpu.PrefetchScalarGridSpec(
            num_scalar_prefetch=0,
            grid=(Mp // tm, Gp // tn, Kp // tk),
            in_specs=[
                pl.BlockSpec((tm, tk), lambda i, j, k: (i, k)),   # frames tile
                pl.BlockSpec((tk, tn), lambda i, j, k: (k, j)),   # weight tile
            ],
            out_specs=pl.BlockSpec((tm, tn), lambda i, j, k: (i, j)),
            scratch_shapes=[pltpu.VMEM((tm, tn), jnp.float32)],
        ),
        compiler_params=pltpu.CompilerParams(
            dimension_semantics=("parallel", "parallel", "arbitrary")),
    )(frames, dense_w)


# ----------------------------------------------------------------------------
# Sampler module (forward of the 'new' version)
# ----------------------------------------------------------------------------
class Sampler:
    def __init__(self, orig_freq=16000, new_freq=16000):
        self.orig_freq = orig_freq
        self.new_freq = new_freq
        self.init_weights()

    def init_weights(self, lowpass_filter_width=6):
        min_freq = min(self.orig_freq, self.new_freq)
        lowpass_cutoff = 0.99 * 0.5 * min_freq
        assert lowpass_cutoff * 2 <= min_freq
        base_freq = math.gcd(int(self.orig_freq), int(self.new_freq))
        self.input_samples_in_unit = int(self.orig_freq) // base_freq
        self.output_samples_in_unit = int(self.new_freq) // base_freq
        window_width = lowpass_filter_width / (2.0 * lowpass_cutoff)
        first_indices, weights = _get_lr_indices_and_weights(
            self.orig_freq, self.new_freq, self.output_samples_in_unit,
            window_width, lowpass_cutoff, lowpass_filter_width)
        self.first_indices = first_indices          # numpy int64 [G]
        self.weights = weights                      # numpy float64 [G, W]

        # ---- dense polyphase weight matrix for the MXU formulation ----------
        G, W = weights.shape
        stride = self.input_samples_in_unit
        fmin = int(first_indices.min())
        offsets = (first_indices - fmin).astype(np.int64)   # >= 0
        K = int(offsets.max()) + W                  # input window per output unit
        Q = -(-K // stride)                         # taps per input-polyphase residue
        Kd = Q * stride
        dense = np.zeros((Kd, G), np.float32)
        for g in range(G):
            dense[offsets[g]:offsets[g] + W, g] = weights[g].astype(np.float32)

        # MXU-friendly padding / tile sizes (static: depend only on the ratio).
        self.tn = 128                               # lane-dense output tiles
        self.tk = min(512, _round_up(Kd, 128))
        Kp = _round_up(Kd, self.tk)
        Gp = _round_up(G, self.tn)
        self.fmin, self.Q, self.Kd, self.Kp, self.Gp = fmin, Q, Kd, Kp, Gp
        self.dense_w = jnp.asarray(np.pad(dense, ((0, Kp - Kd), (0, Gp - G))),
                                   dtype=jnp.float32)       # [Kp, Gp]

    def __call__(self, waveform):
        return self.resample_waveform(waveform)

    def _frame_input(self, waveform, n_units):
        """Reshape-based im2col: frames[c, t, k] = x[c, t*stride + fmin + k]."""
        C, L = waveform.shape
        stride, Q, Kd = self.input_samples_in_unit, self.Q, self.Kd
        Lu = (n_units + Q - 1) * stride
        x = waveform.astype(jnp.float32)
        if self.fmin >= 0:
            x = x[:, self.fmin:] if self.fmin < L else x[:, :0]
        else:
            x = jnp.pad(x, ((0, 0), (-self.fmin, 0)))
        cur = x.shape[1]
        x = jnp.pad(x, ((0, 0), (0, Lu - cur))) if cur < Lu else x[:, :Lu]
        x3 = x.reshape(C, n_units + Q - 1, stride)
        # residue decomposition of the strided windows (no lane gathers anywhere)
        frames = jnp.concatenate([x3[:, q:q + n_units, :] for q in range(Q)], axis=-1)
        return frames.reshape(C * n_units, Kd)

    def resample_waveform(self, waveform):
        C, L = waveform.shape
        tot = _get_num_lr_output_samples(L, self.orig_freq, self.new_freq)
        if tot <= 0:
            return jnp.zeros((C, 0), jnp.float32)
        G = self.output_samples_in_unit
        n_units = (tot - 1) // G + 1

        a = self._frame_input(waveform, n_units)             # [C*n_units, Kd]
        M = C * n_units
        Mp8 = _round_up(M, 8)
        tm = 256 if Mp8 >= 256 else Mp8
        Mp = _round_up(M, tm)
        a = jnp.pad(a, ((0, Mp - M), (0, self.Kp - self.Kd)))

        out = polyphase_matmul_pallas(a, self.dense_w, tm, self.tn, self.tk)  # [Mp, Gp]

        # polyphase interleave == conv_transpose1d(identity) + per-group shift + sum
        out = out[:M, :G].reshape(C, n_units * G)[:, :tot]
        return out


# ----------------------------------------------------------------------------
# Direct float64 reference (straight from the LinearResample definition).
# ----------------------------------------------------------------------------
def _direct_reference(waveform, first_indices, weights, stride, G, tot):
    wv = np.asarray(waveform, np.float64)
    C, L = wv.shape
    W = weights.shape[1]
    j = np.arange(W)
    out = np.zeros((C, tot), np.float64)
    for o in range(tot):
        t, g = divmod(o, G)
        idx = int(first_indices[g]) + t * stride + j
        valid = (idx >= 0) & (idx < L)
        w = np.asarray(weights[g], np.float64) * valid
        out[:, o] = (wv[:, np.clip(idx, 0, L - 1)] * w[None, :]).sum(-1)
    return out


if __name__ == "__main__":
    key = jax.random.PRNGKey(0)
    configs = [
        (16000, 16000, 2, 128),    # identity ratio   (G=1,   stride=1)
        (44100, 16000, 2, 2048),   # real downsample  (G=160, stride=441)
        (8000, 12000, 2, 256),     # upsample         (G=3,   stride=2)
    ]
    for orig, new, C, L in configs:
        key, sub = jax.random.split(key)
        waveform = jax.random.normal(sub, (C, L), dtype=jnp.float32)

        sampler = Sampler(orig_freq=orig, new_freq=new)
        out = jax.block_until_ready(sampler(waveform))

        tot = _get_num_lr_output_samples(L, orig, new)
        assert out.shape == (C, tot), (out.shape, (C, tot))

        ref = _direct_reference(np.asarray(waveform), sampler.first_indices,
                                sampler.weights, sampler.input_samples_in_unit,
                                sampler.output_samples_in_unit, tot)
        np.testing.assert_allclose(np.asarray(out), ref, atol=1e-4, rtol=1e-4)

    print("KERNEL_OK")
</pallas_src>

<mosaic_0001>
module attributes {stable_mosaic.version = 11 : i64} {
  func.func @_matmul_kernel(%arg0: i32, %arg1: i32, %arg2: i32, %arg3: memref<256x128xf32, #tpu.memory_space<vmem>>, %arg4: memref<128x128xf32, #tpu.memory_space<vmem>>, %arg5: memref<256x128xf32, #tpu.memory_space<vmem>>, %arg6: memref<256x128xf32, #tpu.memory_space<vmem>>) attributes {dimension_semantics = [#tpu.dimension_semantics<parallel>, #tpu.dimension_semantics<parallel>, #tpu.dimension_semantics<arbitrary>], iteration_bounds = array<i64: 1, 1, 1>, scalar_prefetch = 0 : i64, scratch_operands = 1 : i64, tpu.core_type = #tpu.core_type<tc>, window_params = [{transform_indices = @transform_0, window_bounds = array<i64: 256, 128>}, {transform_indices = @transform_1, window_bounds = array<i64: 128, 128>}, {transform_indices = @transform_2, window_bounds = array<i64: 256, 128>}]} {
    %c0_i32 = arith.constant 0 : i32
    %0 = arith.cmpi eq, %arg2, %c0_i32 : i32
    %1 = arith.extui %0 : i1 to i32
    %c0_i32_0 = arith.constant 0 : i32
    %2 = arith.cmpi ne, %1, %c0_i32_0 : i32
    scf.if %2 {
      %cst_10 = arith.constant 0.000000e+00 : f32
      %12 = vector.broadcast %cst_10 : f32 to vector<256x128xf32>
      %c0_11 = arith.constant 0 : index
      %c0_12 = arith.constant 0 : index
      %13 = vector.load %arg6[%c0_11, %c0_12] : memref<256x128xf32, #tpu.memory_space<vmem>>, vector<256x128xf32>
      tpu.vector_store %arg6[%c0_11, %c0_12], %12 {strides = array<i32>} : memref<256x128xf32, #tpu.memory_space<vmem>>, vector<256x128xf32>,
    } else {
    }
    %c0 = arith.constant 0 : index
    %c0_1 = arith.constant 0 : index
    %3 = vector.load %arg6[%c0, %c0_1] : memref<256x128xf32, #tpu.memory_space<vmem>>, vector<256x128xf32>
    %c0_2 = arith.constant 0 : index
    %c0_3 = arith.constant 0 : index
    %4 = vector.load %arg3[%c0_2, %c0_3] : memref<256x128xf32, #tpu.memory_space<vmem>>, vector<256x128xf32>
    %c0_4 = arith.constant 0 : index
    %c0_5 = arith.constant 0 : index
    %5 = vector.load %arg4[%c0_4, %c0_5] : memref<128x128xf32, #tpu.memory_space<vmem>>, vector<128x128xf32>
    %cst = arith.constant dense<0.000000e+00> : vector<256x128xf32>
    %6 = tpu.matmul %4, %5, %cst {dimension_numbers = #tpu.dot_dimension_numbers<[1], [0], [0], [1], [0, 0, 1, 1], [], []>} : vector<256x128xf32>, vector<128x128xf32>, vector<256x128xf32> -> vector<256x128xf32>
    %7 = arith.addf %3, %6 : vector<256x128xf32>
    %c0_6 = arith.constant 0 : index
    %c0_7 = arith.constant 0 : index
    %8 = vector.load %arg6[%c0_6, %c0_7] : memref<256x128xf32, #tpu.memory_space<vmem>>, vector<256x128xf32>
    tpu.vector_store %arg6[%c0_6, %c0_7], %7 {strides = array<i32>} : memref<256x128xf32, #tpu.memory_space<vmem>>, vector<256x128xf32>,
    %c0_i32_8 = arith.constant 0 : i32
    %9 = arith.cmpi eq, %arg2, %c0_i32_8 : i32
    %10 = arith.extui %9 : i1 to i32
    %c0_i32_9 = arith.constant 0 : i32
    %11 = arith.cmpi ne, %10, %c0_i32_9 : i32
    scf.if %11 {
      %c0_10 = arith.constant 0 : index
      %c0_11 = arith.constant 0 : index
      %12 = vector.load %arg6[%c0_10, %c0_11] : memref<256x128xf32, #tpu.memory_space<vmem>>, vector<256x128xf32>
      %c0_12 = arith.constant 0 : index
      %c0_13 = arith.constant 0 : index
      %13 = vector.load %arg5[%c0_12, %c0_13] : memref<256x128xf32, #tpu.memory_space<vmem>>, vector<256x128xf32>
      tpu.vector_store %arg5[%c0_12, %c0_13], %12 {strides = array<i32>} : memref<256x128xf32, #tpu.memory_space<vmem>>, vector<256x128xf32>,
    } else {
    }
    return
  }
  func.func @transform_0(%arg0: i32, %arg1: i32, %arg2: i32) -> (i32, i32) {
    %c0_i32 = arith.constant 0 : i32
    return %arg0, %arg2 : i32, i32
  }
  func.func @transform_1(%arg0: i32, %arg1: i32, %arg2: i32) -> (i32, i32) {
    %c0_i32 = arith.constant 0 : i32
    return %arg2, %arg1 : i32, i32
  }
  func.func @transform_2(%arg0: i32, %arg1: i32, %arg2: i32) -> (i32, i32) {
    %c0_i32 = arith.constant 0 : i32
    return %arg0, %arg1 : i32, i32
  }
}

</mosaic_0001>

<llo_original>
// kernel: tpu_custom_call.1
$region0: #{tpu_custom_call.1}
  #allocation0 [shape = 'u32[]', space=smem, size = 0x4, offset = 0x4, fixed_abs, tag = 'smem constant byte address 0x4 - core index']
  #allocation1 [shape = 'u32[144,128]{1,0:T(1,128)}', space=vmem, size = 0x12000, scoped, tag = 'internal scratch']
  #allocation2 [shape = 'f32[256,128]{1,0:T(8,128)}', space=vmem, size = 0x20000, scoped, tag = 'scratch operand']
  %s0 = inlined_call_operand.hbm [shape: f32[256,128], index: 0, kind: input, shape index: {}]
  %s1 = inlined_call_operand.hbm [shape: f32[128,128], index: 1, kind: input, shape index: {}]
  %s2 = inlined_call_operand.hbm [shape: f32[256,128], index: 2, kind: output, shape index: {}]
  %s3 = sld [smem:[#allocation0]]
  $region34: #{tpu_custom_call.1} parent=0
    _
  %s5 = ssub.s32 1, %s3
  %s6 = scalar_select 0, %s5, %s3
  $region1: #{tpu_custom_call.1} parent=0
    #allocation3 [shape = 'u8[131072]{0}', space=vmem, size = 0x20000, scoped, tag = 'input window, operand 0, single buffered']
    #allocation4 [shape = 's32[1]{0}', space=sflag, size = 0x4, scoped, tag = 'scoped memory for tpu_custom_call.1']
    #allocation5 [shape = 's32[1]{0}', space=sflag, size = 0x4, scoped, tag = 'scoped memory for tpu_custom_call.1']
    #allocation6 [shape = 'u8[65536]{0}', space=vmem, size = 0x10000, scoped, tag = 'input window, operand 1, single buffered']
    #allocation7 [shape = 's32[1]{0}', space=sflag, size = 0x4, scoped, tag = 'scoped memory for tpu_custom_call.1']
    #allocation8 [shape = 'u8[131072]{0}', space=vmem, size = 0x20000, scoped, tag = 'output window, operand 0, single buffered']
    %7 = vsyncpa [#allocation4], 0
    %8 = vsyncpa [#allocation7], 0
    %9 = vsyncpa [#allocation5], 0
    // Predicated region
    $region2: #{tpu_custom_call.1} parent=1 // pred_check
      _
    $region3: #{tpu_custom_call.1} parent=1 // pred_check_branch
      %11 = sbr.rel (0) target = $region5
    $region4: #{tpu_custom_call.1} parent=1 // pred_region
      %s13 = ssub.s32 4096, 4096
      %14 = vsyncadd [#allocation4], %s13
      %s15 = sshll.u32 [#allocation3], 4
      %s16 = int_to_ptr.vmem [resolvable:$true] %s15
      %21 = dma.hbm_to_vmem [thread:$0]  %s0, 4096, %s16, [#allocation4], 128, 128, 8
    $region5: #{tpu_custom_call.1} parent=1 // pred_fallthru
      _
    // Predicated region
    $region6: #{tpu_custom_call.1} parent=1 // pred_check
      _
    $region7: #{tpu_custom_call.1} parent=1 // pred_check_branch
      %23 = sbr.rel (0) target = $region9
    $region8: #{tpu_custom_call.1} parent=1 // pred_region
      %s25 = ssub.s32 2048, 2048
      %26 = vsyncadd [#allocation7], %s25
      %s27 = sshll.u32 [#allocation6], 4
      %s28 = int_to_ptr.vmem [resolvable:$true] %s27
      %33 = dma.hbm_to_vmem [thread:$0]  %s1, 2048, %s28, [#allocation7], 128, 128, 8
    $region9: #{tpu_custom_call.1} parent=1 // pred_fallthru
      _
    // Predicated region
    $region10: #{tpu_custom_call.1} parent=1 // pred_check
      _
    $region11: #{tpu_custom_call.1} parent=1 // pred_check_branch
      %35 = sbr.rel (0) target = $region13
    $region12: #{tpu_custom_call.1} parent=1 // pred_region
      %36 = dma.done [#allocation4], 4096
    $region13: #{tpu_custom_call.1} parent=1 // pred_fallthru
      _
    // Predicated region
    $region14: #{tpu_custom_call.1} parent=1 // pred_check
      _
    $region15: #{tpu_custom_call.1} parent=1 // pred_check_branch
      %38 = sbr.rel (0) target = $region17
    $region16: #{tpu_custom_call.1} parent=1 // pred_region
      %39 = dma.done [#allocation7], 2048
    $region17: #{tpu_custom_call.1} parent=1 // pred_fallthru
      _
    %p40 = scmp.eq.s32.totalorder 0, 0
    // Predicated region
    $region18: #{tpu_custom_call.1} parent=1 // pred_check
      %p41 = pneg %p40
    $region19: #{tpu_custom_call.1} parent=1 // pred_check_branch
      %43 = sbr.rel (%p41) target = $region21
    $region20: #{tpu_custom_call.1} parent=1 // pred_region
      %44 = vst [vmem:[#allocation2] sm:$0xff] 0.0
      %45 = vst [vmem:[#allocation2 + $0x8] sm:$0xff] 0.0
      %46 = vst [vmem:[#allocation2 + $0x10] sm:$0xff] 0.0
      %47 = vst [vmem:[#allocation2 + $0x18] sm:$0xff] 0.0
      %48 = vst [vmem:[#allocation2 + $0x20] sm:$0xff] 0.0
      %49 = vst [vmem:[#allocation2 + $0x28] sm:$0xff] 0.0
      %50 = vst [vmem:[#allocation2 + $0x30] sm:$0xff] 0.0
      %51 = vst [vmem:[#allocation2 + $0x38] sm:$0xff] 0.0
      %52 = vst [vmem:[#allocation2 + $0x40] sm:$0xff] 0.0
      %53 = vst [vmem:[#allocation2 + $0x48] sm:$0xff] 0.0
      %54 = vst [vmem:[#allocation2 + $0x50] sm:$0xff] 0.0
      %55 = vst [vmem:[#allocation2 + $0x58] sm:$0xff] 0.0
      %56 = vst [vmem:[#allocation2 + $0x60] sm:$0xff] 0.0
      %57 = vst [vmem:[#allocation2 + $0x68] sm:$0xff] 0.0
      %58 = vst [vmem:[#allocation2 + $0x70] sm:$0xff] 0.0
      %59 = vst [vmem:[#allocation2 + $0x78] sm:$0xff] 0.0
      %60 = vst [vmem:[#allocation2 + $0x80] sm:$0xff] 0.0
      %61 = vst [vmem:[#allocation2 + $0x88] sm:$0xff] 0.0
      %62 = vst [vmem:[#allocation2 + $0x90] sm:$0xff] 0.0
      %63 = vst [vmem:[#allocation2 + $0x98] sm:$0xff] 0.0
      %64 = vst [vmem:[#allocation2 + $0xa0] sm:$0xff] 0.0
      %65 = vst [vmem:[#allocation2 + $0xa8] sm:$0xff] 0.0
      %66 = vst [vmem:[#allocation2 + $0xb0] sm:$0xff] 0.0
      %67 = vst [vmem:[#allocation2 + $0xb8] sm:$0xff] 0.0
      %68 = vst [vmem:[#allocation2 + $0xc0] sm:$0xff] 0.0
      %69 = vst [vmem:[#allocation2 + $0xc8] sm:$0xff] 0.0
      %70 = vst [vmem:[#allocation2 + $0xd0] sm:$0xff] 0.0
      %71 = vst [vmem:[#allocation2 + $0xd8] sm:$0xff] 0.0
      %72 = vst [vmem:[#allocation2 + $0xe0] sm:$0xff] 0.0
      %73 = vst [vmem:[#allocation2 + $0xe8] sm:$0xff] 0.0
      %74 = vst [vmem:[#allocation2 + $0xf0] sm:$0xff] 0.0
      %75 = vst [vmem:[#allocation2 + $0xf8] sm:$0xff] 0.0
    $region21: #{tpu_custom_call.1} parent=1 // pred_fallthru
      _
    %v76 = vld [vmem:[#allocation2] sm:$0xff]
    %v77 = vld [vmem:[#allocation2 + $0x8] sm:$0xff]
    %v78 = vld [vmem:[#allocation2 + $0x10] sm:$0xff]
    %v79 = vld [vmem:[#allocation2 + $0x18] sm:$0xff]
    %v80 = vld [vmem:[#allocation2 + $0x20] sm:$0xff]
    %v81 = vld [vmem:[#allocation2 + $0x28] sm:$0xff]
    %v82 = vld [vmem:[#allocation2 + $0x30] sm:$0xff]
    %v83 = vld [vmem:[#allocation2 + $0x38] sm:$0xff]
    %v84 = vld [vmem:[#allocation2 + $0x40] sm:$0xff]
    %v85 = vld [vmem:[#allocation2 + $0x48] sm:$0xff]
    %v86 = vld [vmem:[#allocation2 + $0x50] sm:$0xff]
    %v87 = vld [vmem:[#allocation2 + $0x58] sm:$0xff]
    %v88 = vld [vmem:[#allocation2 + $0x60] sm:$0xff]
    %v89 = vld [vmem:[#allocation2 + $0x68] sm:$0xff]
    %v90 = vld [vmem:[#allocation2 + $0x70] sm:$0xff]
    %v91 = vld [vmem:[#allocation2 + $0x78] sm:$0xff]
    %v92 = vld [vmem:[#allocation2 + $0x80] sm:$0xff]
    %v93 = vld [vmem:[#allocation2 + $0x88] sm:$0xff]
    %v94 = vld [vmem:[#allocation2 + $0x90] sm:$0xff]
    %v95 = vld [vmem:[#allocation2 + $0x98] sm:$0xff]
    %v96 = vld [vmem:[#allocation2 + $0xa0] sm:$0xff]
    %v97 = vld [vmem:[#allocation2 + $0xa8] sm:$0xff]
    %v98 = vld [vmem:[#allocation2 + $0xb0] sm:$0xff]
    %v99 = vld [vmem:[#allocation2 + $0xb8] sm:$0xff]
    %v100 = vld [vmem:[#allocation2 + $0xc0] sm:$0xff]
    %v101 = vld [vmem:[#allocation2 + $0xc8] sm:$0xff]
    %v102 = vld [vmem:[#allocation2 + $0xd0] sm:$0xff]
    %v103 = vld [vmem:[#allocation2 + $0xd8] sm:$0xff]
    %v104 = vld [vmem:[#allocation2 + $0xe0] sm:$0xff]
    %v105 = vld [vmem:[#allocation2 + $0xe8] sm:$0xff]
    %v106 = vld [vmem:[#allocation2 + $0xf0] sm:$0xff]
    %v107 = vld [vmem:[#allocation2 + $0xf8] sm:$0xff]
    %v108 = vld [vmem:[#allocation3] sm:$0xff]
    %v109 = vld [vmem:[#allocation3 + $0x8] sm:$0xff]
    %v110 = vld [vmem:[#allocation3 + $0x10] sm:$0xff]
    %v111 = vld [vmem:[#allocation3 + $0x18] sm:$0xff]
    %v112 = vld [vmem:[#allocation3 + $0x20] sm:$0xff]
    %v113 = vld [vmem:[#allocation3 + $0x28] sm:$0xff]
    %v114 = vld [vmem:[#allocation3 + $0x30] sm:$0xff]
    %v115 = vld [vmem:[#allocation3 + $0x38] sm:$0xff]
    %v116 = vld [vmem:[#allocation3 + $0x40] sm:$0xff]
    %v117 = vld [vmem:[#allocation3 + $0x48] sm:$0xff]
    %v118 = vld [vmem:[#allocation3 + $0x50] sm:$0xff]
    %v119 = vld [vmem:[#allocation3 + $0x58] sm:$0xff]
    %v120 = vld [vmem:[#allocation3 + $0x60] sm:$0xff]
    %v121 = vld [vmem:[#allocation3 + $0x68] sm:$0xff]
    %v122 = vld [vmem:[#allocation3 + $0x70] sm:$0xff]
    %v123 = vld [vmem:[#allocation3 + $0x78] sm:$0xff]
    %v124 = vld [vmem:[#allocation3 + $0x80] sm:$0xff]
    %v125 = vld [vmem:[#allocation3 + $0x88] sm:$0xff]
    %v126 = vld [vmem:[#allocation3 + $0x90] sm:$0xff]
    %v127 = vld [vmem:[#allocation3 + $0x98] sm:$0xff]
    %v128 = vld [vmem:[#allocation3 + $0xa0] sm:$0xff]
    %v129 = vld [vmem:[#allocation3 + $0xa8] sm:$0xff]
    %v130 = vld [vmem:[#allocation3 + $0xb0] sm:$0xff]
    %v131 = vld [vmem:[#allocation3 + $0xb8] sm:$0xff]
    %v132 = vld [vmem:[#allocation3 + $0xc0] sm:$0xff]
    %v133 = vld [vmem:[#allocation3 + $0xc8] sm:$0xff]
    %v134 = vld [vmem:[#allocation3 + $0xd0] sm:$0xff]
    %v135 = vld [vmem:[#allocation3 + $0xd8] sm:$0xff]
    %v136 = vld [vmem:[#allocation3 + $0xe0] sm:$0xff]
    %v137 = vld [vmem:[#allocation3 + $0xe8] sm:$0xff]
    %v138 = vld [vmem:[#allocation3 + $0xf0] sm:$0xff]
    %v139 = vld [vmem:[#allocation3 + $0xf8] sm:$0xff]
    %v140 = vld [vmem:[#allocation6] sm:$0xff]
    %v141 = vld [vmem:[#allocation6 + $0x8] sm:$0xff]
    %v142 = vld [vmem:[#allocation6 + $0x10] sm:$0xff]
    %v143 = vld [vmem:[#allocation6 + $0x18] sm:$0xff]
    %v144 = vld [vmem:[#allocation6 + $0x20] sm:$0xff]
    %v145 = vld [vmem:[#allocation6 + $0x28] sm:$0xff]
    %v146 = vld [vmem:[#allocation6 + $0x30] sm:$0xff]
    %v147 = vld [vmem:[#allocation6 + $0x38] sm:$0xff]
    %v148 = vld [vmem:[#allocation6 + $0x40] sm:$0xff]
    %v149 = vld [vmem:[#allocation6 + $0x48] sm:$0xff]
    %v150 = vld [vmem:[#allocation6 + $0x50] sm:$0xff]
    %v151 = vld [vmem:[#allocation6 + $0x58] sm:$0xff]
    %v152 = vld [vmem:[#allocation6 + $0x60] sm:$0xff]
    %v153 = vld [vmem:[#allocation6 + $0x68] sm:$0xff]
    %v154 = vld [vmem:[#allocation6 + $0x70] sm:$0xff]
    %v155 = vld [vmem:[#allocation6 + $0x78] sm:$0xff]
    %156 = vmatprep.subr.mxu0 0.0
    %157 = vmatpush1.msra.mxu0 %v155
    %158 = vmatprep.subr.mxu0 0.0
    %159 = vmatpush1.msra.mxu0 %v154
    %160 = vmatprep.subr.mxu0 0.0
    %161 = vmatpush1.msra.mxu0 %v153
    %162 = vmatprep.subr.mxu0 0.0
    %163 = vmatpush1.msra.mxu0 %v152
    %164 = vmatprep.subr.mxu0 0.0
    %165 = vmatpush1.msra.mxu0 %v151
    %166 = vmatprep.subr.mxu0 0.0
    %167 = vmatpush1.msra.mxu0 %v150
    %168 = vmatprep.subr.mxu0 0.0
    %169 = vmatpush1.msra.mxu0 %v149
    %170 = vmatprep.subr.mxu0 0.0
    %171 = vmatpush1.msra.mxu0 %v148
    %172 = vmatprep.subr.mxu0 0.0
    %173 = vmatpush1.msra.mxu0 %v147
    %174 = vmatprep.subr.mxu0 0.0
    %175 = vmatpush1.msra.mxu0 %v146
    %176 = vmatprep.subr.mxu0 0.0
    %177 = vmatpush1.msra.mxu0 %v145
    %178 = vmatprep.subr.mxu0 0.0
    %179 = vmatpush1.msra.mxu0 %v144
    %180 = vmatprep.subr.mxu0 0.0
    %181 = vmatpush1.msra.mxu0 %v143
    %182 = vmatprep.subr.mxu0 0.0
    %183 = vmatpush1.msra.mxu0 %v142
    %184 = vmatprep.subr.mxu0 0.0
    %185 = vmatpush1.msra.mxu0 %v141
    %186 = vmatprep.subr.mxu0 0.0
    %187 = vmatpush1.msra.mxu0 %v140
    %188 = vmatprep.subr.mxu0 0.0
    %189 = vmatpush2.msra.mxu0 0.0
    %190 = vmatprep.subr.mxu0 0.0
    %191 = vmatpush2.msra.mxu0 0.0
    %192 = vmatprep.subr.mxu0 0.0
    %193 = vmatpush2.msra.mxu0 0.0
    %194 = vmatprep.subr.mxu0 0.0
    %195 = vmatpush2.msra.mxu0 0.0
    %196 = vmatprep.subr.mxu0 0.0
    %197 = vmatpush2.msra.mxu0 0.0
    %198 = vmatprep.subr.mxu0 0.0
    %199 = vmatpush2.msra.mxu0 0.0
    %200 = vmatprep.subr.mxu0 0.0
    %201 = vmatpush2.msra.mxu0 0.0
    %202 = vmatprep.subr.mxu0 0.0
    %203 = vmatpush2.msra.mxu0 0.0
    %204 = vmatprep.subr.mxu0 0.0
    %205 = vmatpush2.msra.mxu0 0.0
    %206 = vmatprep.subr.mxu0 0.0
    %207 = vmatpush2.msra.mxu0 0.0
    %208 = vmatprep.subr.mxu0 0.0
    %209 = vmatpush2.msra.mxu0 0.0
    %210 = vmatprep.subr.mxu0 0.0
    %211 = vmatpush2.msra.mxu0 0.0
    %212 = vmatprep.subr.mxu0 0.0
    %213 = vmatpush2.msra.mxu0 0.0
    %214 = vmatprep.subr.mxu0 0.0
    %215 = vmatpush2.msra.mxu0 0.0
    %216 = vmatprep.subr.mxu0 0.0
    %217 = vmatpush2.msra.mxu0 0.0
    %218 = vmatprep.subr.mxu0 0.0
    %219 = vmatpush2.msra.mxu0 0.0
    %220 = vmatprep.mubr.f32.mxu0 0.0
    %221 = vmatmul.mubr.f32.gmra.mxu0 %v108
    %v222 = vpop.f32.mrf.mxu0
    %v223 = vadd.f32 0.0, %v222
    %v224 = vpop.f32.mrf.mxu0
    %225 = vmatprep.mubr.f32.mxu0 0.0
    %226 = vmatmul.mubr.f32.gmra.mxu0 %v109
    %v227 = vpop.f32.mrf.mxu0
    %v228 = vadd.f32 0.0, %v227
    %v229 = vpop.f32.mrf.mxu0
    %230 = vmatprep.mubr.f32.mxu0 0.0
    %231 = vmatmul.mubr.f32.gmra.mxu0 %v110
    %v232 = vpop.f32.mrf.mxu0
    %v233 = vadd.f32 0.0, %v232
    %v234 = vpop.f32.mrf.mxu0
    %235 = vmatprep.mubr.f32.mxu0 0.0
    %236 = vmatmul.mubr.f32.gmra.mxu0 %v111
    %v237 = vpop.f32.mrf.mxu0
    %v238 = vadd.f32 0.0, %v237
    %v239 = vpop.f32.mrf.mxu0
    %240 = vmatprep.mubr.f32.mxu0 0.0
    %241 = vmatmul.mubr.f32.gmra.mxu0 %v112
    %v242 = vpop.f32.mrf.mxu0
    %v243 = vadd.f32 0.0, %v242
    %v244 = vpop.f32.mrf.mxu0
    %245 = vmatprep.mubr.f32.mxu0 0.0
    %246 = vmatmul.mubr.f32.gmra.mxu0 %v113
    %v247 = vpop.f32.mrf.mxu0
    %v248 = vadd.f32 0.0, %v247
    %v249 = vpop.f32.mrf.mxu0
    %250 = vmatprep.mubr.f32.mxu0 0.0
    %251 = vmatmul.mubr.f32.gmra.mxu0 %v114
    %v252 = vpop.f32.mrf.mxu0
    %v253 = vadd.f32 0.0, %v252
    %v254 = vpop.f32.mrf.mxu0
    %255 = vmatprep.mubr.f32.mxu0 0.0
    %256 = vmatmul.mubr.f32.gmra.mxu0 %v115
    %v257 = vpop.f32.mrf.mxu0
    %v258 = vadd.f32 0.0, %v257
    %v259 = vpop.f32.mrf.mxu0
    %260 = vmatprep.mubr.f32.mxu0 0.0
    %261 = vmatmul.mubr.f32.gmra.mxu0 %v116
    %v262 = vpop.f32.mrf.mxu0
    %v263 = vadd.f32 0.0, %v262
    %v264 = vpop.f32.mrf.mxu0
    %265 = vmatprep.mubr.f32.mxu0 0.0
    %266 = vmatmul.mubr.f32.gmra.mxu0 %v117
    %v267 = vpop.f32.mrf.mxu0
    %v268 = vadd.f32 0.0, %v267
    %v269 = vpop.f32.mrf.mxu0
    %270 = vmatprep.mubr.f32.mxu0 0.0
    %271 = vmatmul.mubr.f32.gmra.mxu0 %v118
    %v272 = vpop.f32.mrf.mxu0
    %v273 = vadd.f32 0.0, %v272
    %v274 = vpop.f32.mrf.mxu0
    %275 = vmatprep.mubr.f32.mxu0 0.0
    %276 = vmatmul.mubr.f32.gmra.mxu0 %v119
    %v277 = vpop.f32.mrf.mxu0
    %v278 = vadd.f32 0.0, %v277
    %v279 = vpop.f32.mrf.mxu0
    %280 = vmatprep.mubr.f32.mxu0 0.0
    %281 = vmatmul.mubr.f32.gmra.mxu0 %v120
    %v282 = vpop.f32.mrf.mxu0
    %v283 = vadd.f32 0.0, %v282
    %v284 = vpop.f32.mrf.mxu0
    %285 = vmatprep.mubr.f32.mxu0 0.0
    %286 = vmatmul.mubr.f32.gmra.mxu0 %v121
    %v287 = vpop.f32.mrf.mxu0
    %v288 = vadd.f32 0.0, %v287
    %v289 = vpop.f32.mrf.mxu0
    %290 = vmatprep.mubr.f32.mxu0 0.0
    %291 = vmatmul.mubr.f32.gmra.mxu0 %v122
    %v292 = vpop.f32.mrf.mxu0
    %v293 = vadd.f32 0.0, %v292
    %v294 = vpop.f32.mrf.mxu0
    %295 = vmatprep.mubr.f32.mxu0 0.0
    %296 = vmatmul.mubr.f32.gmra.mxu0 %v123
    %v297 = vpop.f32.mrf.mxu0
    %v298 = vadd.f32 0.0, %v297
    %v299 = vpop.f32.mrf.mxu0
    %300 = vmatprep.mubr.f32.mxu0 0.0
    %301 = vmatmul.mubr.f32.gmra.mxu0 %v124
    %v302 = vpop.f32.mrf.mxu0
    %v303 = vadd.f32 0.0, %v302
    %v304 = vpop.f32.mrf.mxu0
    %305 = vmatprep.mubr.f32.mxu0 0.0
    %306 = vmatmul.mubr.f32.gmra.mxu0 %v125
    %v307 = vpop.f32.mrf.mxu0
    %v308 = vadd.f32 0.0, %v307
    %v309 = vpop.f32.mrf.mxu0
    %310 = vmatprep.mubr.f32.mxu0 0.0
    %311 = vmatmul.mubr.f32.gmra.mxu0 %v126
    %v312 = vpop.f32.mrf.mxu0
    %v313 = vadd.f32 0.0, %v312
    %v314 = vpop.f32.mrf.mxu0
    %315 = vmatprep.mubr.f32.mxu0 0.0
    %316 = vmatmul.mubr.f32.gmra.mxu0 %v127
    %v317 = vpop.f32.mrf.mxu0
    %v318 = vadd.f32 0.0, %v317
    %v319 = vpop.f32.mrf.mxu0
    %320 = vmatprep.mubr.f32.mxu0 0.0
    %321 = vmatmul.mubr.f32.gmra.mxu0 %v128
    %v322 = vpop.f32.mrf.mxu0
    %v323 = vadd.f32 0.0, %v322
    %v324 = vpop.f32.mrf.mxu0
    %325 = vmatprep.mubr.f32.mxu0 0.0
    %326 = vmatmul.mubr.f32.gmra.mxu0 %v129
    %v327 = vpop.f32.mrf.mxu0
    %v328 = vadd.f32 0.0, %v327
    %v329 = vpop.f32.mrf.mxu0
    %330 = vmatprep.mubr.f32.mxu0 0.0
    %331 = vmatmul.mubr.f32.gmra.mxu0 %v130
    %v332 = vpop.f32.mrf.mxu0
    %v333 = vadd.f32 0.0, %v332
    %v334 = vpop.f32.mrf.mxu0
    %335 = vmatprep.mubr.f32.mxu0 0.0
    %336 = vmatmul.mubr.f32.gmra.mxu0 %v131
    %v337 = vpop.f32.mrf.mxu0
    %v338 = vadd.f32 0.0, %v337
    %v339 = vpop.f32.mrf.mxu0
    %340 = vmatprep.mubr.f32.mxu0 0.0
    %341 = vmatmul.mubr.f32.gmra.mxu0 %v132
    %v342 = vpop.f32.mrf.mxu0
    %v343 = vadd.f32 0.0, %v342
    %v344 = vpop.f32.mrf.mxu0
    %345 = vmatprep.mubr.f32.mxu0 0.0
    %346 = vmatmul.mubr.f32.gmra.mxu0 %v133
    %v347 = vpop.f32.mrf.mxu0
    %v348 = vadd.f32 0.0, %v347
    %v349 = vpop.f32.mrf.mxu0
    %350 = vmatprep.mubr.f32.mxu0 0.0
    %351 = vmatmul.mubr.f32.gmra.mxu0 %v134
    %v352 = vpop.f32.mrf.mxu0
    %v353 = vadd.f32 0.0, %v352
    %v354 = vpop.f32.mrf.mxu0
    %355 = vmatprep.mubr.f32.mxu0 0.0
    %356 = vmatmul.mubr.f32.gmra.mxu0 %v135
    %v357 = vpop.f32.mrf.mxu0
    %v358 = vadd.f32 0.0, %v357
    %v359 = vpop.f32.mrf.mxu0
    %360 = vmatprep.mubr.f32.mxu0 0.0
    %361 = vmatmul.mubr.f32.gmra.mxu0 %v136
    %v362 = vpop.f32.mrf.mxu0
    %v363 = vadd.f32 0.0, %v362
    %v364 = vpop.f32.mrf.mxu0
    %365 = vmatprep.mubr.f32.mxu0 0.0
    %366 = vmatmul.mubr.f32.gmra.mxu0 %v137
    %v367 = vpop.f32.mrf.mxu0
    %v368 = vadd.f32 0.0, %v367
    %v369 = vpop.f32.mrf.mxu0
    %370 = vmatprep.mubr.f32.mxu0 0.0
    %371 = vmatmul.mubr.f32.gmra.mxu0 %v138
    %v372 = vpop.f32.mrf.mxu0
    %v373 = vadd.f32 0.0, %v372
    %v374 = vpop.f32.mrf.mxu0
    %375 = vmatprep.mubr.f32.mxu0 0.0
    %376 = vmatmul.mubr.f32.gmra.mxu0 %v139
    %v377 = vpop.f32.mrf.mxu0
    %v378 = vadd.f32 0.0, %v377
    %v379 = vpop.f32.mrf.mxu0
    %380 = vdwg.mxu0
    %v381 = vadd.f32 %v76, %v223
    %v382 = vadd.f32 %v77, %v228
    %v383 = vadd.f32 %v78, %v233
    %v384 = vadd.f32 %v79, %v238
    %v385 = vadd.f32 %v80, %v243
    %v386 = vadd.f32 %v81, %v248
    %v387 = vadd.f32 %v82, %v253
    %v388 = vadd.f32 %v83, %v258
    %v389 = vadd.f32 %v84, %v263
    %v390 = vadd.f32 %v85, %v268
    %v391 = vadd.f32 %v86, %v273
    %v392 = vadd.f32 %v87, %v278
    %v393 = vadd.f32 %v88, %v283
    %v394 = vadd.f32 %v89, %v288
    %v395 = vadd.f32 %v90, %v293
    %v396 = vadd.f32 %v91, %v298
    %v397 = vadd.f32 %v92, %v303
    %v398 = vadd.f32 %v93, %v308
    %v399 = vadd.f32 %v94, %v313
    %v400 = vadd.f32 %v95, %v318
    %v401 = vadd.f32 %v96, %v323
    %v402 = vadd.f32 %v97, %v328
    %v403 = vadd.f32 %v98, %v333
    %v404 = vadd.f32 %v99, %v338
    %v405 = vadd.f32 %v100, %v343
    %v406 = vadd.f32 %v101, %v348
    %v407 = vadd.f32 %v102, %v353
    %v408 = vadd.f32 %v103, %v358
    %v409 = vadd.f32 %v104, %v363
    %v410 = vadd.f32 %v105, %v368
    %v411 = vadd.f32 %v106, %v373
    %v412 = vadd.f32 %v107, %v378
    %413 = vst [vmem:[#allocation2] sm:$0xff] %v381
    %414 = vst [vmem:[#allocation2 + $0x8] sm:$0xff] %v382
    %415 = vst [vmem:[#allocation2 + $0x10] sm:$0xff] %v383
    %416 = vst [vmem:[#allocation2 + $0x18] sm:$0xff] %v384
    %417 = vst [vmem:[#allocation2 + $0x20] sm:$0xff] %v385
    %418 = vst [vmem:[#allocation2 + $0x28] sm:$0xff] %v386
    %419 = vst [vmem:[#allocation2 + $0x30] sm:$0xff] %v387
    %420 = vst [vmem:[#allocation2 + $0x38] sm:$0xff] %v388
    %421 = vst [vmem:[#allocation2 + $0x40] sm:$0xff] %v389
    %422 = vst [vmem:[#allocation2 + $0x48] sm:$0xff] %v390
    %423 = vst [vmem:[#allocation2 + $0x50] sm:$0xff] %v391
    %424 = vst [vmem:[#allocation2 + $0x58] sm:$0xff] %v392
    %425 = vst [vmem:[#allocation2 + $0x60] sm:$0xff] %v393
    %426 = vst [vmem:[#allocation2 + $0x68] sm:$0xff] %v394
    %427 = vst [vmem:[#allocation2 + $0x70] sm:$0xff] %v395
    %428 = vst [vmem:[#allocation2 + $0x78] sm:$0xff] %v396
    %429 = vst [vmem:[#allocation2 + $0x80] sm:$0xff] %v397
    %430 = vst [vmem:[#allocation2 + $0x88] sm:$0xff] %v398
    %431 = vst [vmem:[#allocation2 + $0x90] sm:$0xff] %v399
    %432 = vst [vmem:[#allocation2 + $0x98] sm:$0xff] %v400
    %433 = vst [vmem:[#allocation2 + $0xa0] sm:$0xff] %v401
    %434 = vst [vmem:[#allocation2 + $0xa8] sm:$0xff] %v402
    %435 = vst [vmem:[#allocation2 + $0xb0] sm:$0xff] %v403
    %436 = vst [vmem:[#allocation2 + $0xb8] sm:$0xff] %v404
    %437 = vst [vmem:[#allocation2 + $0xc0] sm:$0xff] %v405
    %438 = vst [vmem:[#allocation2 + $0xc8] sm:$0xff] %v406
    %439 = vst [vmem:[#allocation2 + $0xd0] sm:$0xff] %v407
    %440 = vst [vmem:[#allocation2 + $0xd8] sm:$0xff] %v408
    %441 = vst [vmem:[#allocation2 + $0xe0] sm:$0xff] %v409
    %442 = vst [vmem:[#allocation2 + $0xe8] sm:$0xff] %v410
    %443 = vst [vmem:[#allocation2 + $0xf0] sm:$0xff] %v411
    %444 = vst [vmem:[#allocation2 + $0xf8] sm:$0xff] %v412
    // Predicated region
    $region22: #{tpu_custom_call.1} parent=1 // pred_check
      %p445 = pneg %p40
    $region23: #{tpu_custom_call.1} parent=1 // pred_check_branch
      %447 = sbr.rel (%p445) target = $region25
    $region24: #{tpu_custom_call.1} parent=1 // pred_region
      %v448 = vld [vmem:[#allocation2] sm:$0xff]
      %v449 = vld [vmem:[#allocation2 + $0x8] sm:$0xff]
      %v450 = vld [vmem:[#allocation2 + $0x10] sm:$0xff]
      %v451 = vld [vmem:[#allocation2 + $0x18] sm:$0xff]
      %v452 = vld [vmem:[#allocation2 + $0x20] sm:$0xff]
      %v453 = vld [vmem:[#allocation2 + $0x28] sm:$0xff]
      %v454 = vld [vmem:[#allocation2 + $0x30] sm:$0xff]
      %v455 = vld [vmem:[#allocation2 + $0x38] sm:$0xff]
      %v456 = vld [vmem:[#allocation2 + $0x40] sm:$0xff]
      %v457 = vld [vmem:[#allocation2 + $0x48] sm:$0xff]
      %v458 = vld [vmem:[#allocation2 + $0x50] sm:$0xff]
      %v459 = vld [vmem:[#allocation2 + $0x58] sm:$0xff]
      %v460 = vld [vmem:[#allocation2 + $0x60] sm:$0xff]
      %v461 = vld [vmem:[#allocation2 + $0x68] sm:$0xff]
      %v462 = vld [vmem:[#allocation2 + $0x70] sm:$0xff]
      %v463 = vld [vmem:[#allocation2 + $0x78] sm:$0xff]
      %v464 = vld [vmem:[#allocation2 + $0x80] sm:$0xff]
      %v465 = vld [vmem:[#allocation2 + $0x88] sm:$0xff]
      %v466 = vld [vmem:[#allocation2 + $0x90] sm:$0xff]
      %v467 = vld [vmem:[#allocation2 + $0x98] sm:$0xff]
      %v468 = vld [vmem:[#allocation2 + $0xa0] sm:$0xff]
      %v469 = vld [vmem:[#allocation2 + $0xa8] sm:$0xff]
      %v470 = vld [vmem:[#allocation2 + $0xb0] sm:$0xff]
      %v471 = vld [vmem:[#allocation2 + $0xb8] sm:$0xff]
      %v472 = vld [vmem:[#allocation2 + $0xc0] sm:$0xff]
      %v473 = vld [vmem:[#allocation2 + $0xc8] sm:$0xff]
      %v474 = vld [vmem:[#allocation2 + $0xd0] sm:$0xff]
      %v475 = vld [vmem:[#allocation2 + $0xd8] sm:$0xff]
      %v476 = vld [vmem:[#allocation2 + $0xe0] sm:$0xff]
      %v477 = vld [vmem:[#allocation2 + $0xe8] sm:$0xff]
      %v478 = vld [vmem:[#allocation2 + $0xf0] sm:$0xff]
      %v479 = vld [vmem:[#allocation2 + $0xf8] sm:$0xff]
      %480 = vst [vmem:[#allocation8] sm:$0xff] %v448
      %481 = vst [vmem:[#allocation8 + $0x8] sm:$0xff] %v449
      %482 = vst [vmem:[#allocation8 + $0x10] sm:$0xff] %v450
      %483 = vst [vmem:[#allocation8 + $0x18] sm:$0xff] %v451
      %484 = vst [vmem:[#allocation8 + $0x20] sm:$0xff] %v452
      %485 = vst [vmem:[#allocation8 + $0x28] sm:$0xff] %v453
      %486 = vst [vmem:[#allocation8 + $0x30] sm:$0xff] %v454
      %487 = vst [vmem:[#allocation8 + $0x38] sm:$0xff] %v455
      %488 = vst [vmem:[#allocation8 + $0x40] sm:$0xff] %v456
      %489 = vst [vmem:[#allocation8 + $0x48] sm:$0xff] %v457
      %490 = vst [vmem:[#allocation8 + $0x50] sm:$0xff] %v458
      %491 = vst [vmem:[#allocation8 + $0x58] sm:$0xff] %v459
      %492 = vst [vmem:[#allocation8 + $0x60] sm:$0xff] %v460
      %493 = vst [vmem:[#allocation8 + $0x68] sm:$0xff] %v461
      %494 = vst [vmem:[#allocation8 + $0x70] sm:$0xff] %v462
      %495 = vst [vmem:[#allocation8 + $0x78] sm:$0xff] %v463
      %496 = vst [vmem:[#allocation8 + $0x80] sm:$0xff] %v464
      %497 = vst [vmem:[#allocation8 + $0x88] sm:$0xff] %v465
      %498 = vst [vmem:[#allocation8 + $0x90] sm:$0xff] %v466
      %499 = vst [vmem:[#allocation8 + $0x98] sm:$0xff] %v467
      %500 = vst [vmem:[#allocation8 + $0xa0] sm:$0xff] %v468
      %501 = vst [vmem:[#allocation8 + $0xa8] sm:$0xff] %v469
      %502 = vst [vmem:[#allocation8 + $0xb0] sm:$0xff] %v470
      %503 = vst [vmem:[#allocation8 + $0xb8] sm:$0xff] %v471
      %504 = vst [vmem:[#allocation8 + $0xc0] sm:$0xff] %v472
      %505 = vst [vmem:[#allocation8 + $0xc8] sm:$0xff] %v473
      %506 = vst [vmem:[#allocation8 + $0xd0] sm:$0xff] %v474
      %507 = vst [vmem:[#allocation8 + $0xd8] sm:$0xff] %v475
      %508 = vst [vmem:[#allocation8 + $0xe0] sm:$0xff] %v476
      %509 = vst [vmem:[#allocation8 + $0xe8] sm:$0xff] %v477
      %510 = vst [vmem:[#allocation8 + $0xf0] sm:$0xff] %v478
      %511 = vst [vmem:[#allocation8 + $0xf8] sm:$0xff] %v479
    $region25: #{tpu_custom_call.1} parent=1 // pred_fallthru
      _
    // Predicated region
    $region26: #{tpu_custom_call.1} parent=1 // pred_check
      _
    $region27: #{tpu_custom_call.1} parent=1 // pred_check_branch
      %513 = sbr.rel (0) target = $region29
    $region28: #{tpu_custom_call.1} parent=1 // pred_region
      %s515 = ssub.s32 4096, 4096
      %516 = vsyncadd [#allocation5], %s515
      %s517 = sshll.u32 [#allocation8], 4
      %s518 = int_to_ptr.vmem [resolvable:$true] %s517
      %523 = dma.vmem_to_hbm [thread:$0]  %s518, 4096, %s2, [#allocation5], 128, 128, 8
    $region29: #{tpu_custom_call.1} parent=1 // pred_fallthru
      _
    // Predicated region
    $region30: #{tpu_custom_call.1} parent=1 // pred_check
      _
    $region31: #{tpu_custom_call.1} parent=1 // pred_check_branch
      %525 = sbr.rel (0) target = $region33
    $region32: #{tpu_custom_call.1} parent=1 // pred_region
      %526 = dma.done [#allocation5], 4096
    $region33: #{tpu_custom_call.1} parent=1 // pred_fallthru
      _
    %527 = vsyncpa [#allocation4], 1
    %528 = vsyncpa [#allocation7], 1
    %529 = vsyncpa [#allocation5], 1

</llo_original>
